<compile_context>
chip_gen: v5e
topology: v5e:2x2
jax: 0.10.0
libtpu: 0.0.40
codegen_flags: <defaults>
</compile_context>

<pallas_src>
import functools
import re

import numpy as np
import jax
import jax.numpy as jnp
from jax.experimental import pallas as pl
from jax.experimental.pallas import tpu as pltpu

LAYERS = [2, 100, 100, 100, 100, 100, 100, 2]
PAD = 128                    # lane width for the hidden layers
IN_PAD = 8                   # narrow input slab: cols [x, t, 0, ...]
OUT_PAD = 8                  # narrow output slab: cols [S, I, 0, ...]
MATMUL_DTYPE = jnp.bfloat16  # MXU input / activation storage dtype (f32 accumulate).
                             # Set to jnp.float32 for strict-f32 numerics.


def _tpu_generation():
    """Best-effort TPU generation (5, 6, 7, ...). Defaults to 6 if unknown."""
    try:
        kind = jax.devices()[0].device_kind.lower()
    except Exception:
        return 6
    m = re.search(r"v(\d+)", kind)
    if m:
        return int(m.group(1))
    return 6


_GEN = _tpu_generation()
# bf16 tanh only where the EUP/VPU are bf16-capable (v6e / v7x).
_BF16_TANH = (_GEN >= 6) and (MATMUL_DTYPE == jnp.bfloat16)
# Bigger batch tile on v5e/v6e (128 MiB VMEM) to amortize per-grid-step overhead;
# keep 512 on v7x (64 MiB/TC and to preserve >=2 parallel steps for the 2 TensorCores).
_MAX_TM = 512 if _GEN >= 7 else 1024


def _mlp_kernel(x_ref, w0_ref, b0_ref, wmid_ref, bmid_ref, wlast_ref, blast_ref,
                o_ref, *, n_mid, bf16_tanh):
    """One batch tile of the PINN MLP.

    x_ref:     (TM, IN_PAD)       rows [x, t, 0, ...]          (f32)
    w0_ref:    (8, PAD)           first-layer weight, rows 0,1 (f32)
    b0_ref:    (1, PAD)           first-layer bias             (f32)
    wmid_ref:  (n_mid, PAD, PAD)  hidden-layer weights         (MATMUL_DTYPE)
    bmid_ref:  (n_mid, 1, PAD)    hidden-layer biases          (f32)
    wlast_ref: (PAD, OUT_PAD)     last-layer weight            (MATMUL_DTYPE)
    blast_ref: (1, OUT_PAD)       last-layer bias              (f32)
    o_ref:     (TM, OUT_PAD)      output, lanes 0,1 = S, I     (f32)
    """
    tm = x_ref.shape[0]
    half = tm // 2                # tm is a multiple of 16 -> half is sublane-aligned

    act_dtype = wmid_ref.dtype
    tanh_dtype = act_dtype if bf16_tanh else jnp.float32

    def activation(z):
        # z is f32 (MXU accumulate + f32 bias).  On v6e/v7x the tanh itself runs in
        # bf16 (packed vregs, 2x EUP throughput); the stored result is always
        # act_dtype so the next matmul needs no extra cast.
        return jnp.tanh(z.astype(tanh_dtype)).astype(act_dtype)

    w0x = w0_ref[0:1, :]          # (1, PAD)
    w0t = w0_ref[1:2, :]          # (1, PAD)
    b0 = b0_ref[...]              # (1, PAD)

    def first_layer(rows):
        # Layer 0 on the VPU: h = x * W0[0,:] + t * W0[1,:] + b0 (f32), then tanh.
        xc = rows[:, 0:1]
        tc = rows[:, 1:2]
        return activation(xc * w0x + tc * w0t + b0)

    x_all = x_ref[...]
    ha = first_layer(x_all[:half, :])
    hb = first_layer(x_all[half:, :])

    # Hidden layers: MXU matmuls with f32 accumulation.  The two batch halves are
    # independent dependence chains, so one half's tanh (EUP slot) overlaps the other
    # half's matmul (MXU push).
    for i in range(n_mid):        # static unroll (n_mid = 5)
        w = wmid_ref[i]           # (PAD, PAD)
        b = bmid_ref[i]           # (1, PAD) f32
        za = jnp.dot(ha, w, preferred_element_type=jnp.float32) + b
        zb = jnp.dot(hb, w, preferred_element_type=jnp.float32) + b
        ha = activation(za)
        hb = activation(zb)

    # Last layer: single fused (TM,128)x(128,OUT_PAD) matmul over the whole tile
    # (halves are contiguous), no activation.
    h = jnp.concatenate([ha, hb], axis=0)          # (TM, PAD)
    wl = wlast_ref[...]                            # (PAD, OUT_PAD)
    bl = blast_ref[...]                            # (1, OUT_PAD) f32
    o = jnp.dot(h, wl, preferred_element_type=jnp.float32) + bl
    o_ref[...] = o.astype(o_ref.dtype)


def prepare_params(weights, biases):
    """Pack/zero-pad the per-layer params ONCE (hoisted out of the forward call).

    weights[i]: (layers[i], layers[i+1]); biases[i]: (layers[i+1],).
    """
    depth = len(weights)
    assert depth >= 3
    n_mid = depth - 2

    w0 = jnp.zeros((8, PAD), jnp.float32)
    w0 = w0.at[: weights[0].shape[0], : weights[0].shape[1]].set(
        weights[0].astype(jnp.float32))
    b0 = jnp.zeros((1, PAD), jnp.float32)
    b0 = b0.at[0, : biases[0].shape[0]].set(biases[0].astype(jnp.float32))

    wmid = jnp.zeros((n_mid, PAD, PAD), jnp.float32)
    bmid = jnp.zeros((n_mid, 1, PAD), jnp.float32)
    for k in range(n_mid):
        w, b = weights[k + 1], biases[k + 1]
        wmid = wmid.at[k, : w.shape[0], : w.shape[1]].set(w.astype(jnp.float32))
        bmid = bmid.at[k, 0, : b.shape[0]].set(b.astype(jnp.float32))

    wlast = jnp.zeros((PAD, OUT_PAD), jnp.float32)
    wlast = wlast.at[: weights[-1].shape[0], : weights[-1].shape[1]].set(
        weights[-1].astype(jnp.float32))
    blast = jnp.zeros((1, OUT_PAD), jnp.float32)
    blast = blast.at[0, : biases[-1].shape[0]].set(biases[-1].astype(jnp.float32))

    return {
        "w0": w0,
        "b0": b0,
        "wmid": wmid.astype(MATMUL_DTYPE),   # resident weights; f32 accumulate on MXU
        "bmid": bmid,
        "wlast": wlast.astype(MATMUL_DTYPE),
        "blast": blast,
    }


def _round_up(v, m):
    return ((v + m - 1) // m) * m


def _choose_tile(n):
    """Pick (n_pad, tm): tm multiple of 16 (so each half-tile is sublane-aligned)."""
    n16 = _round_up(max(n, 16), 16)
    if _GEN >= 7 and 64 <= n16 <= _MAX_TM:
        # v7x has 2 TensorCores: always emit >= 2 "parallel" grid steps for
        # non-trivial batches so both cores are busy.
        tm = _round_up((n16 + 1) // 2, 16)
        return 2 * tm, tm
    if n16 <= _MAX_TM:
        return n16, n16              # tiny problem: exactly one grid step
    tm = _MAX_TM
    return _round_up(n16, tm), tm


@jax.jit
def pinn_net_sir(x, t, params):
    """Pallas forward of PhysicsInformedNN.net_SIR.

    x, t: (N, 1) float32; params from prepare_params().  Returns (S, I), each (N, 1).
    """
    N = x.shape[0]
    n_pad, tm = _choose_tile(N)
    n_mid = params["wmid"].shape[0]

    # Narrow (n_pad, 8) input slab: cols 0,1 = x, t  (16x less HBM than 128-wide pad).
    inp = jnp.zeros((n_pad, IN_PAD), jnp.float32)
    inp = inp.at[:N, 0:1].set(x.astype(jnp.float32))
    inp = inp.at[:N, 1:2].set(t.astype(jnp.float32))

    weight_bytes = sum(int(np.prod(v.shape)) * v.dtype.itemsize
                       for v in params.values())
    cost = pl.CostEstimate(
        flops=2 * n_pad * (n_mid * PAD * PAD + 2 * PAD + PAD * OUT_PAD),
        transcendentals=(n_mid + 1) * n_pad * PAD,
        bytes_accessed=n_pad * (IN_PAD + OUT_PAD) * 4 + weight_bytes,
    )

    out = pl.pallas_call(
        functools.partial(_mlp_kernel, n_mid=n_mid, bf16_tanh=_BF16_TANH),
        out_shape=jax.ShapeDtypeStruct((n_pad, OUT_PAD), jnp.float32),
        grid_spec=pltpu.PrefetchScalarGridSpec(
            num_scalar_prefetch=0,
            grid=(n_pad // tm,),
            in_specs=[
                pl.BlockSpec((tm, IN_PAD), lambda i: (i, 0)),          # inputs (tiled)
                pl.BlockSpec((8, PAD), lambda i: (0, 0)),              # w0 (resident)
                pl.BlockSpec((1, PAD), lambda i: (0, 0)),              # b0
                pl.BlockSpec((n_mid, PAD, PAD), lambda i: (0, 0, 0)),  # hidden W (resident)
                pl.BlockSpec((n_mid, 1, PAD), lambda i: (0, 0, 0)),    # hidden b
                pl.BlockSpec((PAD, OUT_PAD), lambda i: (0, 0)),        # last W
                pl.BlockSpec((1, OUT_PAD), lambda i: (0, 0)),          # last b
            ],
            out_specs=pl.BlockSpec((tm, OUT_PAD), lambda i: (i, 0)),
        ),
        compiler_params=pltpu.CompilerParams(
            dimension_semantics=("parallel",),
        ),
        cost_estimate=cost,
    )(inp, params["w0"], params["b0"], params["wmid"], params["bmid"],
      params["wlast"], params["blast"])

    S = out[:N, 0:1]
    I = out[:N, 1:2]
    return S, I


def _init_params(key, layers):
    """torch.nn.Linear-style init (U(-1/sqrt(fan_in), +)); weights stored (in, out)."""
    weights, biases = [], []
    for i in range(len(layers) - 1):
        fan_in, fan_out = layers[i], layers[i + 1]
        key, kw, kb = jax.random.split(key, 3)
        bound = 1.0 / np.sqrt(fan_in)
        weights.append(jax.random.uniform(kw, (fan_in, fan_out), jnp.float32, -bound, bound))
        biases.append(jax.random.uniform(kb, (fan_out,), jnp.float32, -bound, bound))
    return weights, biases


def _reference_net_sir(x, t, weights, biases):
    """Pure-JAX reference emulating the kernel's mixed precision: hidden-layer matmuls
    see MATMUL_DTYPE inputs/weights with f32 accumulation; tanh precision mirrors the
    generation-dependent kernel setting."""
    h = jnp.concatenate([x, t], axis=1).astype(jnp.float32)
    depth = len(weights)
    tanh_dtype = MATMUL_DTYPE if _BF16_TANH else jnp.float32
    for i in range(depth):
        w = weights[i].astype(jnp.float32)
        b = biases[i].astype(jnp.float32)
        if i >= 1:
            z = jnp.dot(h.astype(MATMUL_DTYPE), w.astype(MATMUL_DTYPE),
                        preferred_element_type=jnp.float32) + b
        else:
            z = h @ w + b
        if i < depth - 1:
            h = jnp.tanh(z.astype(tanh_dtype)).astype(MATMUL_DTYPE)
        else:
            h = z
    return h[:, 0:1], h[:, 1:2]


if __name__ == "__main__":
    key = jax.random.PRNGKey(0)
    kparam, kx, kt = jax.random.split(key, 3)

    weights, biases = _init_params(kparam, LAYERS)
    params = prepare_params(weights, biases)   # padded once, reused for every call

    # Small collocation-point batch (like X_IC / X_f rows): columns [x, t].
    N = 96
    x = jax.random.uniform(kx, (N, 1), jnp.float32, 0.0, 1.0)
    t = jax.random.uniform(kt, (N, 1), jnp.float32, 0.0, 1.0)

    S, I = pinn_net_sir(x, t, params)
    S, I = jax.block_until_ready((S, I))

    S_ref, I_ref = _reference_net_sir(x, t, weights, biases)
    np.testing.assert_allclose(np.asarray(S), np.asarray(S_ref), rtol=2e-2, atol=2e-2)
    np.testing.assert_allclose(np.asarray(I), np.asarray(I_ref), rtol=2e-2, atol=2e-2)
    assert S.shape == (N, 1) and I.shape == (N, 1)

    # TODO(synk): net_SIR_x / net_r_SIR need input gradients (torch.autograd.grad);
    # pl.pallas_call has no autodiff rule here, so those require a custom_jvp/custom_vjp
    # (or a fused value+tangent kernel) wrapped around pinn_net_sir — not implemented.
    print("KERNEL_OK")
</pallas_src>

<mosaic_0001>
module attributes {stable_mosaic.version = 11 : i64} {
  func.func @_mlp_kernel(%arg0: i32, %arg1: memref<96x8xf32, #tpu.memory_space<vmem>>, %arg2: memref<8x128xf32, #tpu.memory_space<vmem>>, %arg3: memref<1x128xf32, #tpu.memory_space<vmem>>, %arg4: memref<5x128x128xbf16, #tpu.memory_space<vmem>>, %arg5: memref<5x1x128xf32, #tpu.memory_space<vmem>>, %arg6: memref<128x8xbf16, #tpu.memory_space<vmem>>, %arg7: memref<1x8xf32, #tpu.memory_space<vmem>>, %arg8: memref<96x8xf32, #tpu.memory_space<vmem>>) attributes {dimension_semantics = [#tpu.dimension_semantics<parallel>], iteration_bounds = array<i64: 1>, scalar_prefetch = 0 : i64, scratch_operands = 0 : i64, tpu.core_type = #tpu.core_type<tc>, window_params = [{transform_indices = @transform_0, window_bounds = array<i64: 96, 8>}, {pipeline_mode = #tpu.pipeline_mode<synchronous>, transform_indices = @transform_1, window_bounds = array<i64: 8, 128>}, {pipeline_mode = #tpu.pipeline_mode<synchronous>, transform_indices = @transform_2, window_bounds = array<i64: 1, 128>}, {pipeline_mode = #tpu.pipeline_mode<synchronous>, transform_indices = @transform_3, window_bounds = array<i64: 5, 128, 128>}, {pipeline_mode = #tpu.pipeline_mode<synchronous>, transform_indices = @transform_4, window_bounds = array<i64: 5, 1, 128>}, {pipeline_mode = #tpu.pipeline_mode<synchronous>, transform_indices = @transform_5, window_bounds = array<i64: 128, 8>}, {pipeline_mode = #tpu.pipeline_mode<synchronous>, transform_indices = @transform_6, window_bounds = array<i64: 1, 8>}, {transform_indices = @transform_7, window_bounds = array<i64: 96, 8>}]} {
    %c0 = arith.constant 0 : index
    %c0_0 = arith.constant 0 : index
    %0 = vector.load %arg2[%c0, %c0_0] : memref<8x128xf32, #tpu.memory_space<vmem>>, vector<1x128xf32>
    %c1 = arith.constant 1 : index
    %c0_1 = arith.constant 0 : index
    %1 = vector.load %arg2[%c1, %c0_1] : memref<8x128xf32, #tpu.memory_space<vmem>>, vector<1x128xf32>
    %c0_2 = arith.constant 0 : index
    %c0_3 = arith.constant 0 : index
    %2 = vector.load %arg3[%c0_2, %c0_3] : memref<1x128xf32, #tpu.memory_space<vmem>>, vector<1x128xf32>
    %c0_4 = arith.constant 0 : index
    %c0_5 = arith.constant 0 : index
    %3 = vector.load %arg1[%c0_4, %c0_5] : memref<96x8xf32, #tpu.memory_space<vmem>>, vector<96x8xf32>
    %4 = vector.extract_strided_slice %3 {offsets = [0, 0], sizes = [48, 8], strides = [1, 1]} : vector<96x8xf32> to vector<48x8xf32>
    %5 = vector.extract_strided_slice %4 {offsets = [0, 0], sizes = [48, 1], strides = [1, 1]} : vector<48x8xf32> to vector<48x1xf32>
    %6 = vector.extract_strided_slice %4 {offsets = [0, 1], sizes = [48, 1], strides = [1, 1]} : vector<48x8xf32> to vector<48x1xf32>
    %7 = vector.broadcast %5 : vector<48x1xf32> to vector<48x128xf32>
    %8 = vector.broadcast %0 : vector<1x128xf32> to vector<48x128xf32>
    %9 = arith.mulf %7, %8 : vector<48x128xf32>
    %10 = vector.broadcast %6 : vector<48x1xf32> to vector<48x128xf32>
    %11 = vector.broadcast %1 : vector<1x128xf32> to vector<48x128xf32>
    %12 = arith.mulf %10, %11 : vector<48x128xf32>
    %13 = arith.addf %9, %12 : vector<48x128xf32>
    %14 = vector.broadcast %2 : vector<1x128xf32> to vector<48x128xf32>
    %15 = arith.addf %13, %14 : vector<48x128xf32>
    %16 = arith.truncf %15 : vector<48x128xf32> to vector<48x128xbf16>
    %17 = math.tanh %16 : vector<48x128xbf16>
    %18 = vector.extract_strided_slice %3 {offsets = [48, 0], sizes = [48, 8], strides = [1, 1]} : vector<96x8xf32> to vector<48x8xf32>
    %19 = vector.extract_strided_slice %18 {offsets = [0, 0], sizes = [48, 1], strides = [1, 1]} : vector<48x8xf32> to vector<48x1xf32>
    %20 = vector.extract_strided_slice %18 {offsets = [0, 1], sizes = [48, 1], strides = [1, 1]} : vector<48x8xf32> to vector<48x1xf32>
    %21 = vector.broadcast %19 : vector<48x1xf32> to vector<48x128xf32>
    %22 = vector.broadcast %0 : vector<1x128xf32> to vector<48x128xf32>
    %23 = arith.mulf %21, %22 : vector<48x128xf32>
    %24 = vector.broadcast %20 : vector<48x1xf32> to vector<48x128xf32>
    %25 = vector.broadcast %1 : vector<1x128xf32> to vector<48x128xf32>
    %26 = arith.mulf %24, %25 : vector<48x128xf32>
    %27 = arith.addf %23, %26 : vector<48x128xf32>
    %28 = vector.broadcast %2 : vector<1x128xf32> to vector<48x128xf32>
    %29 = arith.addf %27, %28 : vector<48x128xf32>
    %30 = arith.truncf %29 : vector<48x128xf32> to vector<48x128xbf16>
    %31 = math.tanh %30 : vector<48x128xbf16>
    %c0_6 = arith.constant 0 : index
    %c0_7 = arith.constant 0 : index
    %c0_8 = arith.constant 0 : index
    %32 = vector.load %arg4[%c0_6, %c0_7, %c0_8] : memref<5x128x128xbf16, #tpu.memory_space<vmem>>, vector<1x128x128xbf16>
    %33 = vector.shape_cast %32 : vector<1x128x128xbf16> to vector<128x128xbf16>
    %c0_9 = arith.constant 0 : index
    %c0_10 = arith.constant 0 : index
    %c0_11 = arith.constant 0 : index
    %34 = vector.load %arg5[%c0_9, %c0_10, %c0_11] : memref<5x1x128xf32, #tpu.memory_space<vmem>>, vector<1x1x128xf32>
    %35 = vector.shape_cast %34 : vector<1x1x128xf32> to vector<1x128xf32>
    %cst = arith.constant dense<0.000000e+00> : vector<48x128xf32>
    %36 = tpu.matmul %17, %33, %cst {dimension_numbers = #tpu.dot_dimension_numbers<[1], [0], [0], [1], [0, 0, 1, 1], [], []>} : vector<48x128xbf16>, vector<128x128xbf16>, vector<48x128xf32> -> vector<48x128xf32>
    %37 = vector.broadcast %35 : vector<1x128xf32> to vector<48x128xf32>
    %38 = arith.addf %36, %37 : vector<48x128xf32>
    %cst_12 = arith.constant dense<0.000000e+00> : vector<48x128xf32>
    %39 = tpu.matmul %31, %33, %cst_12 {dimension_numbers = #tpu.dot_dimension_numbers<[1], [0], [0], [1], [0, 0, 1, 1], [], []>} : vector<48x128xbf16>, vector<128x128xbf16>, vector<48x128xf32> -> vector<48x128xf32>
    %40 = vector.broadcast %35 : vector<1x128xf32> to vector<48x128xf32>
    %41 = arith.addf %39, %40 : vector<48x128xf32>
    %42 = arith.truncf %38 : vector<48x128xf32> to vector<48x128xbf16>
    %43 = math.tanh %42 : vector<48x128xbf16>
    %44 = arith.truncf %41 : vector<48x128xf32> to vector<48x128xbf16>
    %45 = math.tanh %44 : vector<48x128xbf16>
    %c1_13 = arith.constant 1 : index
    %c0_14 = arith.constant 0 : index
    %c0_15 = arith.constant 0 : index
    %46 = vector.load %arg4[%c1_13, %c0_14, %c0_15] : memref<5x128x128xbf16, #tpu.memory_space<vmem>>, vector<1x128x128xbf16>
    %47 = vector.shape_cast %46 : vector<1x128x128xbf16> to vector<128x128xbf16>
    %c1_16 = arith.constant 1 : index
    %c0_17 = arith.constant 0 : index
    %c0_18 = arith.constant 0 : index
    %48 = vector.load %arg5[%c1_16, %c0_17, %c0_18] : memref<5x1x128xf32, #tpu.memory_space<vmem>>, vector<1x1x128xf32>
    %49 = vector.shape_cast %48 : vector<1x1x128xf32> to vector<1x128xf32>
    %cst_19 = arith.constant dense<0.000000e+00> : vector<48x128xf32>
    %50 = tpu.matmul %43, %47, %cst_19 {dimension_numbers = #tpu.dot_dimension_numbers<[1], [0], [0], [1], [0, 0, 1, 1], [], []>} : vector<48x128xbf16>, vector<128x128xbf16>, vector<48x128xf32> -> vector<48x128xf32>
    %51 = vector.broadcast %49 : vector<1x128xf32> to vector<48x128xf32>
    %52 = arith.addf %50, %51 : vector<48x128xf32>
    %cst_20 = arith.constant dense<0.000000e+00> : vector<48x128xf32>
    %53 = tpu.matmul %45, %47, %cst_20 {dimension_numbers = #tpu.dot_dimension_numbers<[1], [0], [0], [1], [0, 0, 1, 1], [], []>} : vector<48x128xbf16>, vector<128x128xbf16>, vector<48x128xf32> -> vector<48x128xf32>
    %54 = vector.broadcast %49 : vector<1x128xf32> to vector<48x128xf32>
    %55 = arith.addf %53, %54 : vector<48x128xf32>
    %56 = arith.truncf %52 : vector<48x128xf32> to vector<48x128xbf16>
    %57 = math.tanh %56 : vector<48x128xbf16>
    %58 = arith.truncf %55 : vector<48x128xf32> to vector<48x128xbf16>
    %59 = math.tanh %58 : vector<48x128xbf16>
    %c2 = arith.constant 2 : index
    %c0_21 = arith.constant 0 : index
    %c0_22 = arith.constant 0 : index
    %60 = vector.load %arg4[%c2, %c0_21, %c0_22] : memref<5x128x128xbf16, #tpu.memory_space<vmem>>, vector<1x128x128xbf16>
    %61 = vector.shape_cast %60 : vector<1x128x128xbf16> to vector<128x128xbf16>
    %c2_23 = arith.constant 2 : index
    %c0_24 = arith.constant 0 : index
    %c0_25 = arith.constant 0 : index
    %62 = vector.load %arg5[%c2_23, %c0_24, %c0_25] : memref<5x1x128xf32, #tpu.memory_space<vmem>>, vector<1x1x128xf32>
    %63 = vector.shape_cast %62 : vector<1x1x128xf32> to vector<1x128xf32>
    %cst_26 = arith.constant dense<0.000000e+00> : vector<48x128xf32>
    %64 = tpu.matmul %57, %61, %cst_26 {dimension_numbers = #tpu.dot_dimension_numbers<[1], [0], [0], [1], [0, 0, 1, 1], [], []>} : vector<48x128xbf16>, vector<128x128xbf16>, vector<48x128xf32> -> vector<48x128xf32>
    %65 = vector.broadcast %63 : vector<1x128xf32> to vector<48x128xf32>
    %66 = arith.addf %64, %65 : vector<48x128xf32>
    %cst_27 = arith.constant dense<0.000000e+00> : vector<48x128xf32>
    %67 = tpu.matmul %59, %61, %cst_27 {dimension_numbers = #tpu.dot_dimension_numbers<[1], [0], [0], [1], [0, 0, 1, 1], [], []>} : vector<48x128xbf16>, vector<128x128xbf16>, vector<48x128xf32> -> vector<48x128xf32>
    %68 = vector.broadcast %63 : vector<1x128xf32> to vector<48x128xf32>
    %69 = arith.addf %67, %68 : vector<48x128xf32>
    %70 = arith.truncf %66 : vector<48x128xf32> to vector<48x128xbf16>
    %71 = math.tanh %70 : vector<48x128xbf16>
    %72 = arith.truncf %69 : vector<48x128xf32> to vector<48x128xbf16>
    %73 = math.tanh %72 : vector<48x128xbf16>
    %c3 = arith.constant 3 : index
    %c0_28 = arith.constant 0 : index
    %c0_29 = arith.constant 0 : index
    %74 = vector.load %arg4[%c3, %c0_28, %c0_29] : memref<5x128x128xbf16, #tpu.memory_space<vmem>>, vector<1x128x128xbf16>
    %75 = vector.shape_cast %74 : vector<1x128x128xbf16> to vector<128x128xbf16>
    %c3_30 = arith.constant 3 : index
    %c0_31 = arith.constant 0 : index
    %c0_32 = arith.constant 0 : index
    %76 = vector.load %arg5[%c3_30, %c0_31, %c0_32] : memref<5x1x128xf32, #tpu.memory_space<vmem>>, vector<1x1x128xf32>
    %77 = vector.shape_cast %76 : vector<1x1x128xf32> to vector<1x128xf32>
    %cst_33 = arith.constant dense<0.000000e+00> : vector<48x128xf32>
    %78 = tpu.matmul %71, %75, %cst_33 {dimension_numbers = #tpu.dot_dimension_numbers<[1], [0], [0], [1], [0, 0, 1, 1], [], []>} : vector<48x128xbf16>, vector<128x128xbf16>, vector<48x128xf32> -> vector<48x128xf32>
    %79 = vector.broadcast %77 : vector<1x128xf32> to vector<48x128xf32>
    %80 = arith.addf %78, %79 : vector<48x128xf32>
    %cst_34 = arith.constant dense<0.000000e+00> : vector<48x128xf32>
    %81 = tpu.matmul %73, %75, %cst_34 {dimension_numbers = #tpu.dot_dimension_numbers<[1], [0], [0], [1], [0, 0, 1, 1], [], []>} : vector<48x128xbf16>, vector<128x128xbf16>, vector<48x128xf32> -> vector<48x128xf32>
    %82 = vector.broadcast %77 : vector<1x128xf32> to vector<48x128xf32>
    %83 = arith.addf %81, %82 : vector<48x128xf32>
    %84 = arith.truncf %80 : vector<48x128xf32> to vector<48x128xbf16>
    %85 = math.tanh %84 : vector<48x128xbf16>
    %86 = arith.truncf %83 : vector<48x128xf32> to vector<48x128xbf16>
    %87 = math.tanh %86 : vector<48x128xbf16>
    %c4 = arith.constant 4 : index
    %c0_35 = arith.constant 0 : index
    %c0_36 = arith.constant 0 : index
    %88 = vector.load %arg4[%c4, %c0_35, %c0_36] : memref<5x128x128xbf16, #tpu.memory_space<vmem>>, vector<1x128x128xbf16>
    %89 = vector.shape_cast %88 : vector<1x128x128xbf16> to vector<128x128xbf16>
    %c4_37 = arith.constant 4 : index
    %c0_38 = arith.constant 0 : index
    %c0_39 = arith.constant 0 : index
    %90 = vector.load %arg5[%c4_37, %c0_38, %c0_39] : memref<5x1x128xf32, #tpu.memory_space<vmem>>, vector<1x1x128xf32>
    %91 = vector.shape_cast %90 : vector<1x1x128xf32> to vector<1x128xf32>
    %cst_40 = arith.constant dense<0.000000e+00> : vector<48x128xf32>
    %92 = tpu.matmul %85, %89, %cst_40 {dimension_numbers = #tpu.dot_dimension_numbers<[1], [0], [0], [1], [0, 0, 1, 1], [], []>} : vector<48x128xbf16>, vector<128x128xbf16>, vector<48x128xf32> -> vector<48x128xf32>
    %93 = vector.broadcast %91 : vector<1x128xf32> to vector<48x128xf32>
    %94 = arith.addf %92, %93 : vector<48x128xf32>
    %cst_41 = arith.constant dense<0.000000e+00> : vector<48x128xf32>
    %95 = tpu.matmul %87, %89, %cst_41 {dimension_numbers = #tpu.dot_dimension_numbers<[1], [0], [0], [1], [0, 0, 1, 1], [], []>} : vector<48x128xbf16>, vector<128x128xbf16>, vector<48x128xf32> -> vector<48x128xf32>
    %96 = vector.broadcast %91 : vector<1x128xf32> to vector<48x128xf32>
    %97 = arith.addf %95, %96 : vector<48x128xf32>
    %98 = arith.truncf %94 : vector<48x128xf32> to vector<48x128xbf16>
    %99 = math.tanh %98 : vector<48x128xbf16>
    %100 = arith.truncf %97 : vector<48x128xf32> to vector<48x128xbf16>
    %101 = math.tanh %100 : vector<48x128xbf16>
    %102 = tpu.concatenate %99, %101 in 0 : vector<48x128xbf16>, vector<48x128xbf16> -> vector<96x128xbf16>
    %c0_42 = arith.constant 0 : index
    %c0_43 = arith.constant 0 : index
    %103 = vector.load %arg6[%c0_42, %c0_43] : memref<128x8xbf16, #tpu.memory_space<vmem>>, vector<128x8xbf16>
    %c0_44 = arith.constant 0 : index
    %c0_45 = arith.constant 0 : index
    %104 = vector.load %arg7[%c0_44, %c0_45] : memref<1x8xf32, #tpu.memory_space<vmem>>, vector<1x8xf32>
    %cst_46 = arith.constant dense<0.000000e+00> : vector<96x8xf32>
    %105 = tpu.matmul %102, %103, %cst_46 {dimension_numbers = #tpu.dot_dimension_numbers<[1], [0], [0], [1], [0, 0, 1, 1], [], []>} : vector<96x128xbf16>, vector<128x8xbf16>, vector<96x8xf32> -> vector<96x8xf32>
    %106 = vector.broadcast %104 : vector<1x8xf32> to vector<96x8xf32>
    %107 = arith.addf %105, %106 : vector<96x8xf32>
    %c0_47 = arith.constant 0 : index
    %c0_48 = arith.constant 0 : index
    %108 = vector.load %arg8[%c0_47, %c0_48] : memref<96x8xf32, #tpu.memory_space<vmem>>, vector<96x8xf32>
    tpu.vector_store %arg8[%c0_47, %c0_48], %107 {strides = array<i32>} : memref<96x8xf32, #tpu.memory_space<vmem>>, vector<96x8xf32>,
    return
  }
  func.func @transform_0(%arg0: i32) -> (i32, i32) {
    %c0_i32 = arith.constant 0 : i32
    %c0_i32_0 = arith.constant 0 : i32
    return %arg0, %c0_i32 : i32, i32
  }
  func.func @transform_1(%arg0: i32) -> (i32, i32) {
    %c0_i32 = arith.constant 0 : i32
    %c0_i32_0 = arith.constant 0 : i32
    %c0_i32_1 = arith.constant 0 : i32
    return %c0_i32, %c0_i32_0 : i32, i32
  }
  func.func @transform_2(%arg0: i32) -> (i32, i32) {
    %c0_i32 = arith.constant 0 : i32
    %c0_i32_0 = arith.constant 0 : i32
    %c0_i32_1 = arith.constant 0 : i32
    return %c0_i32, %c0_i32_0 : i32, i32
  }
  func.func @transform_3(%arg0: i32) -> (i32, i32, i32) {
    %c0_i32 = arith.constant 0 : i32
    %c0_i32_0 = arith.constant 0 : i32
    %c0_i32_1 = arith.constant 0 : i32
    %c0_i32_2 = arith.constant 0 : i32
    return %c0_i32, %c0_i32_0, %c0_i32_1 : i32, i32, i32
  }
  func.func @transform_4(%arg0: i32) -> (i32, i32, i32) {
    %c0_i32 = arith.constant 0 : i32
    %c0_i32_0 = arith.constant 0 : i32
    %c0_i32_1 = arith.constant 0 : i32
    %c0_i32_2 = arith.constant 0 : i32
    return %c0_i32, %c0_i32_0, %c0_i32_1 : i32, i32, i32
  }
  func.func @transform_5(%arg0: i32) -> (i32, i32) {
    %c0_i32 = arith.constant 0 : i32
    %c0_i32_0 = arith.constant 0 : i32
    %c0_i32_1 = arith.constant 0 : i32
    return %c0_i32, %c0_i32_0 : i32, i32
  }
  func.func @transform_6(%arg0: i32) -> (i32, i32) {
    %c0_i32 = arith.constant 0 : i32
    %c0_i32_0 = arith.constant 0 : i32
    %c0_i32_1 = arith.constant 0 : i32
    return %c0_i32, %c0_i32_0 : i32, i32
  }
  func.func @transform_7(%arg0: i32) -> (i32, i32) {
    %c0_i32 = arith.constant 0 : i32
    %c0_i32_0 = arith.constant 0 : i32
    return %arg0, %c0_i32 : i32, i32
  }
}

</mosaic_0001>

<llo_original>
// kernel: pinn_net_sir.1
$region0: #{pinn_net_sir.1}
  #allocation0 [shape = 'u32[]', space=smem, size = 0x4, offset = 0x4, fixed_abs, tag = 'smem constant byte address 0x4 - core index']
  #allocation1 [shape = 'u32[72,128]{1,0:T(1,128)}', space=vmem, size = 0x9000, scoped, tag = 'internal scratch']
  %s0 = inlined_call_operand.vmem [shape: f32[96,8], index: 0, kind: input, shape index: {}]
  %s1 = inlined_call_operand.vmem [shape: f32[8,128], index: 1, kind: input, shape index: {}]
  %s2 = inlined_call_operand.vmem [shape: f32[1,128], index: 2, kind: input, shape index: {}]
  %s3 = inlined_call_operand.vmem [shape: bf16[5,128,128], index: 3, kind: input, shape index: {}]
  %s4 = inlined_call_operand.vmem [shape: f32[5,1,128], index: 4, kind: input, shape index: {}]
  %s5 = inlined_call_operand.vmem [shape: bf16[128,8], index: 5, kind: input, shape index: {}]
  %s6 = inlined_call_operand.vmem [shape: f32[1,8], index: 6, kind: input, shape index: {}]
  %s7 = inlined_call_operand.vmem [shape: f32[96,8], index: 7, kind: output, shape index: {}]
  %s8 = sld [smem:[#allocation0]]
  $region38: #{pinn_net_sir.1} parent=0
    _
  %s10 = ssub.s32 1, %s8
  %s11 = scalar_select 0, %s10, %s8
  // Predicated region
  $region2: #{pinn_net_sir.1} parent=0 // pred_check
    _
  $region3: #{pinn_net_sir.1} parent=0 // pred_check_branch
    %13 = sbr.rel (0) target = $region5
  $region4: #{pinn_net_sir.1} parent=0 // pred_region
    _
  $region5: #{pinn_net_sir.1} parent=0 // pred_fallthru
    _
  // Predicated region
  $region6: #{pinn_net_sir.1} parent=0 // pred_check
    _
  $region7: #{pinn_net_sir.1} parent=0 // pred_check_branch
    %15 = sbr.rel (0) target = $region9
  $region8: #{pinn_net_sir.1} parent=0 // pred_region
    _
  $region9: #{pinn_net_sir.1} parent=0 // pred_fallthru
    _
  // Predicated region
  $region10: #{pinn_net_sir.1} parent=0 // pred_check
    _
  $region11: #{pinn_net_sir.1} parent=0 // pred_check_branch
    %17 = sbr.rel (0) target = $region13
  $region12: #{pinn_net_sir.1} parent=0 // pred_region
    _
  $region13: #{pinn_net_sir.1} parent=0 // pred_fallthru
    _
  // Predicated region
  $region14: #{pinn_net_sir.1} parent=0 // pred_check
    _
  $region15: #{pinn_net_sir.1} parent=0 // pred_check_branch
    %19 = sbr.rel (0) target = $region17
  $region16: #{pinn_net_sir.1} parent=0 // pred_region
    _
  $region17: #{pinn_net_sir.1} parent=0 // pred_fallthru
    _
  // Predicated region
  $region18: #{pinn_net_sir.1} parent=0 // pred_check
    _
  $region19: #{pinn_net_sir.1} parent=0 // pred_check_branch
    %21 = sbr.rel (0) target = $region21
  $region20: #{pinn_net_sir.1} parent=0 // pred_region
    _
  $region21: #{pinn_net_sir.1} parent=0 // pred_fallthru
    _
  // Predicated region
  $region22: #{pinn_net_sir.1} parent=0 // pred_check
    _
  $region23: #{pinn_net_sir.1} parent=0 // pred_check_branch
    %23 = sbr.rel (0) target = $region25
  $region24: #{pinn_net_sir.1} parent=0 // pred_region
    _
  $region25: #{pinn_net_sir.1} parent=0 // pred_fallthru
    _
  // Predicated region
  $region26: #{pinn_net_sir.1} parent=0 // pred_check
    _
  $region27: #{pinn_net_sir.1} parent=0 // pred_check_branch
    %25 = sbr.rel (0) target = $region29
  $region28: #{pinn_net_sir.1} parent=0 // pred_region
    _
  $region29: #{pinn_net_sir.1} parent=0 // pred_fallthru
    _
  %v26 = vld [vmem:[%s1] sm:$0x1]
  %v27 = vld [vmem:[%s1 + $0x1] sm:$0x1]
  %v28 = vld [vmem:[%s2] sm:$0x1]
  %v29 = vld [vmem:[%s0] sm:$0xff]
  %v30 = vld [vmem:[%s0 + $0x8] sm:$0xff]
  %v31 = vld [vmem:[%s0 + $0x10] sm:$0xff]
  %v32 = vld [vmem:[%s0 + $0x18] sm:$0xff]
  %v33 = vld [vmem:[%s0 + $0x20] sm:$0xff]
  %v34 = vld [vmem:[%s0 + $0x28] sm:$0xff]
  %v35 = vld [vmem:[%s0 + $0x30] sm:$0xff]
  %v36 = vld [vmem:[%s0 + $0x38] sm:$0xff]
  %v37 = vld [vmem:[%s0 + $0x40] sm:$0xff]
  %v38 = vld [vmem:[%s0 + $0x48] sm:$0xff]
  %v39 = vld [vmem:[%s0 + $0x50] sm:$0xff]
  %v40 = vld [vmem:[%s0 + $0x58] sm:$0xff]
  %42 = vset.pattern.permute.xlu0 0
  %43 = vperm.xlu0 %42, %v29
  %v44 = vpop.permute.xlu0 %43
  %47 = vset.pattern.permute.xlu0 0
  %48 = vperm.xlu0 %47, %v30
  %v49 = vpop.permute.xlu0 %48
  %52 = vset.pattern.permute.xlu0 0
  %53 = vperm.xlu0 %52, %v31
  %v54 = vpop.permute.xlu0 %53
  %57 = vset.pattern.permute.xlu0 0
  %58 = vperm.xlu0 %57, %v32
  %v59 = vpop.permute.xlu0 %58
  %62 = vset.pattern.permute.xlu0 0
  %63 = vperm.xlu0 %62, %v33
  %v64 = vpop.permute.xlu0 %63
  %67 = vset.pattern.permute.xlu0 0
  %68 = vperm.xlu0 %67, %v34
  %v69 = vpop.permute.xlu0 %68
  %v71 = vperm.slane %v26, 0
  %v72 = vmul.f32 %v44, %v71
  %v73 = vmul.f32 %v49, %v71
  %v74 = vmul.f32 %v54, %v71
  %v75 = vmul.f32 %v59, %v71
  %v76 = vmul.f32 %v64, %v71
  %v77 = vmul.f32 %v69, %v71
  %78 = vset.pattern.permute.xlu0 1
  %79 = vperm.xlu0 %78, %v29
  %v80 = vpop.permute.xlu0 %79
  %82 = vset.pattern.permute.xlu0 1
  %83 = vperm.xlu0 %82, %v30
  %v84 = vpop.permute.xlu0 %83
  %86 = vset.pattern.permute.xlu0 1
  %87 = vperm.xlu0 %86, %v31
  %v88 = vpop.permute.xlu0 %87
  %90 = vset.pattern.permute.xlu0 1
  %91 = vperm.xlu0 %90, %v32
  %v92 = vpop.permute.xlu0 %91
  %94 = vset.pattern.permute.xlu0 1
  %95 = vperm.xlu0 %94, %v33
  %v96 = vpop.permute.xlu0 %95
  %98 = vset.pattern.permute.xlu0 1
  %99 = vperm.xlu0 %98, %v34
  %v100 = vpop.permute.xlu0 %99
  %v102 = vperm.slane %v27, 0
  %v103 = vmul.f32 %v80, %v102
  %v104 = vmul.f32 %v84, %v102
  %v105 = vmul.f32 %v88, %v102
  %v106 = vmul.f32 %v92, %v102
  %v107 = vmul.f32 %v96, %v102
  %v108 = vmul.f32 %v100, %v102
  %v109 = vadd.f32 %v72, %v103
  %v110 = vadd.f32 %v73, %v104
  %v111 = vadd.f32 %v74, %v105
  %v112 = vadd.f32 %v75, %v106
  %v113 = vadd.f32 %v76, %v107
  %v114 = vadd.f32 %v77, %v108
  %v116 = vperm.slane %v28, 0
  %v118 = vadd.f32 %v109, %v116
  %v119 = vadd.f32 %v110, %v116
  %v120 = vadd.f32 %v111, %v116
  %v121 = vadd.f32 %v112, %v116
  %v122 = vadd.f32 %v113, %v116
  %v123 = vadd.f32 %v114, %v116
  %v124 = vpack.c.bf16 %v119, %v118
  %v125 = vpack.c.bf16 %v121, %v120
  %v126 = vpack.c.bf16 %v123, %v122
  %v127 = vunpack.c.l.bf16 %v124
  %v128 = vunpack.c.h.bf16 %v124
  %v129 = vunpack.c.l.bf16 %v125
  %v130 = vunpack.c.h.bf16 %v125
  %v131 = vunpack.c.l.bf16 %v126
  %v132 = vunpack.c.h.bf16 %v126
  %v133 = vtanh.pop %v127
  %v134 = vtanh.pop %v128
  %v135 = vtanh.pop %v129
  %v136 = vtanh.pop %v130
  %v137 = vtanh.pop %v131
  %v138 = vtanh.pop %v132
  %v139 = vpack.c.bf16 %v134, %v133
  %v140 = vpack.c.bf16 %v136, %v135
  %v141 = vpack.c.bf16 %v138, %v137
  %143 = vset.pattern.permute.xlu0 0
  %144 = vperm.xlu0 %143, %v35
  %v145 = vpop.permute.xlu0 %144
  %148 = vset.pattern.permute.xlu0 0
  %149 = vperm.xlu0 %148, %v36
  %v150 = vpop.permute.xlu0 %149
  %153 = vset.pattern.permute.xlu0 0
  %154 = vperm.xlu0 %153, %v37
  %v155 = vpop.permute.xlu0 %154
  %158 = vset.pattern.permute.xlu0 0
  %159 = vperm.xlu0 %158, %v38
  %v160 = vpop.permute.xlu0 %159
  %163 = vset.pattern.permute.xlu0 0
  %164 = vperm.xlu0 %163, %v39
  %v165 = vpop.permute.xlu0 %164
  %168 = vset.pattern.permute.xlu0 0
  %169 = vperm.xlu0 %168, %v40
  %v170 = vpop.permute.xlu0 %169
  %v172 = vmul.f32 %v145, %v71
  %v173 = vmul.f32 %v150, %v71
  %v174 = vmul.f32 %v155, %v71
  %v175 = vmul.f32 %v160, %v71
  %v176 = vmul.f32 %v165, %v71
  %v177 = vmul.f32 %v170, %v71
  %178 = vset.pattern.permute.xlu0 1
  %179 = vperm.xlu0 %178, %v35
  %v180 = vpop.permute.xlu0 %179
  %182 = vset.pattern.permute.xlu0 1
  %183 = vperm.xlu0 %182, %v36
  %v184 = vpop.permute.xlu0 %183
  %186 = vset.pattern.permute.xlu0 1
  %187 = vperm.xlu0 %186, %v37
  %v188 = vpop.permute.xlu0 %187
  %190 = vset.pattern.permute.xlu0 1
  %191 = vperm.xlu0 %190, %v38
  %v192 = vpop.permute.xlu0 %191
  %194 = vset.pattern.permute.xlu0 1
  %195 = vperm.xlu0 %194, %v39
  %v196 = vpop.permute.xlu0 %195
  %198 = vset.pattern.permute.xlu0 1
  %199 = vperm.xlu0 %198, %v40
  %v200 = vpop.permute.xlu0 %199
  %v202 = vmul.f32 %v180, %v102
  %v203 = vmul.f32 %v184, %v102
  %v204 = vmul.f32 %v188, %v102
  %v205 = vmul.f32 %v192, %v102
  %v206 = vmul.f32 %v196, %v102
  %v207 = vmul.f32 %v200, %v102
  %v208 = vadd.f32 %v172, %v202
  %v209 = vadd.f32 %v173, %v203
  %v210 = vadd.f32 %v174, %v204
  %v211 = vadd.f32 %v175, %v205
  %v212 = vadd.f32 %v176, %v206
  %v213 = vadd.f32 %v177, %v207
  %v214 = vadd.f32 %v208, %v116
  %v215 = vadd.f32 %v209, %v116
  %v216 = vadd.f32 %v210, %v116
  %v217 = vadd.f32 %v211, %v116
  %v218 = vadd.f32 %v212, %v116
  %v219 = vadd.f32 %v213, %v116
  %v220 = vpack.c.bf16 %v215, %v214
  %v221 = vpack.c.bf16 %v217, %v216
  %v222 = vpack.c.bf16 %v219, %v218
  %v223 = vunpack.c.l.bf16 %v220
  %v224 = vunpack.c.h.bf16 %v220
  %v225 = vunpack.c.l.bf16 %v221
  %v226 = vunpack.c.h.bf16 %v221
  %v227 = vunpack.c.l.bf16 %v222
  %v228 = vunpack.c.h.bf16 %v222
  %v229 = vtanh.pop %v223
  %v230 = vtanh.pop %v224
  %v231 = vtanh.pop %v225
  %v232 = vtanh.pop %v226
  %v233 = vtanh.pop %v227
  %v234 = vtanh.pop %v228
  %v235 = vpack.c.bf16 %v230, %v229
  %v236 = vpack.c.bf16 %v232, %v231
  %v237 = vpack.c.bf16 %v234, %v233
  %v238 = vld [vmem:[%s3] sm:$0xf]
  %v239 = vld [vmem:[%s3 + $0x4] sm:$0xf]
  %v240 = vld [vmem:[%s3 + $0x8] sm:$0xf]
  %v241 = vld [vmem:[%s3 + $0xc] sm:$0xf]
  %v242 = vld [vmem:[%s3 + $0x10] sm:$0xf]
  %v243 = vld [vmem:[%s3 + $0x14] sm:$0xf]
  %v244 = vld [vmem:[%s3 + $0x18] sm:$0xf]
  %v245 = vld [vmem:[%s3 + $0x1c] sm:$0xf]
  %v246 = vld [vmem:[%s3 + $0x20] sm:$0xf]
  %v247 = vld [vmem:[%s3 + $0x24] sm:$0xf]
  %v248 = vld [vmem:[%s3 + $0x28] sm:$0xf]
  %v249 = vld [vmem:[%s3 + $0x2c] sm:$0xf]
  %v250 = vld [vmem:[%s3 + $0x30] sm:$0xf]
  %v251 = vld [vmem:[%s3 + $0x34] sm:$0xf]
  %v252 = vld [vmem:[%s3 + $0x38] sm:$0xf]
  %v253 = vld [vmem:[%s3 + $0x3c] sm:$0xf]
  %v254 = vld [vmem:[%s4] sm:$0x1]
  %v256 = vperm.slane %v254, 0
  %v274 = vunpack.c.l.b16 %v238
  %v275 = vunpack.c.l.b16 %v239
  %v276 = vunpack.c.l.b16 %v240
  %v277 = vunpack.c.l.b16 %v241
  %v278 = vunpack.c.l.b16 %v242
  %v279 = vunpack.c.l.b16 %v243
  %v280 = vunpack.c.l.b16 %v244
  %v281 = vunpack.c.l.b16 %v245
  %v282 = vunpack.c.l.b16 %v246
  %v283 = vunpack.c.l.b16 %v247
  %v284 = vunpack.c.l.b16 %v248
  %v285 = vunpack.c.l.b16 %v249
  %v286 = vunpack.c.l.b16 %v250
  %v287 = vunpack.c.l.b16 %v251
  %v288 = vunpack.c.l.b16 %v252
  %v289 = vunpack.c.l.b16 %v253
  %v290 = vpack.c.b16 %v275, %v274
  %v291 = vpack.c.b16 %v277, %v276
  %v292 = vpack.c.b16 %v279, %v278
  %v293 = vpack.c.b16 %v281, %v280
  %v294 = vpack.c.b16 %v283, %v282
  %v295 = vpack.c.b16 %v285, %v284
  %v296 = vpack.c.b16 %v287, %v286
  %v297 = vpack.c.b16 %v289, %v288
  %306 = vmatpush.bf16.msra.mxu0 %v297
  %307 = vmatpush.bf16.msra.mxu0 %v296
  %308 = vmatpush.bf16.msra.mxu0 %v295
  %309 = vmatpush.bf16.msra.mxu0 %v294
  %310 = vmatpush.bf16.msra.mxu0 %v293
  %311 = vmatpush.bf16.msra.mxu0 %v292
  %312 = vmatpush.bf16.msra.mxu0 %v291
  %313 = vmatpush.bf16.msra.mxu0 %v290
  %314 = vmatmul.bf16.gmra.mxu0 %v139
  %v315 = vpop.f32.mrf.mxu0
  %v316 = vadd.f32 %v256, %v315
  %v317 = vpop.f32.mrf.mxu0
  %v318 = vadd.f32 %v256, %v317
  %319 = vmatmul.bf16.gmra.mxu0 %v140
  %v320 = vpop.f32.mrf.mxu0
  %v321 = vadd.f32 %v256, %v320
  %v322 = vpop.f32.mrf.mxu0
  %v323 = vadd.f32 %v256, %v322
  %324 = vmatmul.bf16.gmra.mxu0 %v141
  %v325 = vpop.f32.mrf.mxu0
  %v326 = vadd.f32 %v256, %v325
  %v327 = vpop.f32.mrf.mxu0
  %v328 = vadd.f32 %v256, %v327
  %329 = vdwg.mxu0
  %330 = vmatpush.bf16.msra.mxu0 %v297
  %331 = vmatpush.bf16.msra.mxu0 %v296
  %332 = vmatpush.bf16.msra.mxu0 %v295
  %333 = vmatpush.bf16.msra.mxu0 %v294
  %334 = vmatpush.bf16.msra.mxu0 %v293
  %335 = vmatpush.bf16.msra.mxu0 %v292
  %336 = vmatpush.bf16.msra.mxu0 %v291
  %337 = vmatpush.bf16.msra.mxu0 %v290
  %338 = vmatmul.bf16.gmra.mxu0 %v235
  %v339 = vpop.f32.mrf.mxu0
  %v340 = vadd.f32 %v256, %v339
  %v341 = vpop.f32.mrf.mxu0
  %v342 = vadd.f32 %v256, %v341
  %343 = vmatmul.bf16.gmra.mxu0 %v236
  %v344 = vpop.f32.mrf.mxu0
  %v345 = vadd.f32 %v256, %v344
  %v346 = vpop.f32.mrf.mxu0
  %v347 = vadd.f32 %v256, %v346
  %348 = vmatmul.bf16.gmra.mxu0 %v237
  %v349 = vpop.f32.mrf.mxu0
  %v350 = vadd.f32 %v256, %v349
  %v351 = vpop.f32.mrf.mxu0
  %v352 = vadd.f32 %v256, %v351
  %353 = vdwg.mxu0
  %v354 = vpack.c.bf16 %v318, %v316
  %v355 = vpack.c.bf16 %v323, %v321
  %v356 = vpack.c.bf16 %v328, %v326
  %v357 = vunpack.c.l.bf16 %v354
  %v358 = vunpack.c.h.bf16 %v354
  %v359 = vunpack.c.l.bf16 %v355
  %v360 = vunpack.c.h.bf16 %v355
  %v361 = vunpack.c.l.bf16 %v356
  %v362 = vunpack.c.h.bf16 %v356
  %v363 = vtanh.pop %v357
  %v364 = vtanh.pop %v358
  %v365 = vtanh.pop %v359
  %v366 = vtanh.pop %v360
  %v367 = vtanh.pop %v361
  %v368 = vtanh.pop %v362
  %v369 = vpack.c.bf16 %v364, %v363
  %v370 = vpack.c.bf16 %v366, %v365
  %v371 = vpack.c.bf16 %v368, %v367
  %v372 = vpack.c.bf16 %v342, %v340
  %v373 = vpack.c.bf16 %v347, %v345
  %v374 = vpack.c.bf16 %v352, %v350
  %v375 = vunpack.c.l.bf16 %v372
  %v376 = vunpack.c.h.bf16 %v372
  %v377 = vunpack.c.l.bf16 %v373
  %v378 = vunpack.c.h.bf16 %v373
  %v379 = vunpack.c.l.bf16 %v374
  %v380 = vunpack.c.h.bf16 %v374
  %v381 = vtanh.pop %v375
  %v382 = vtanh.pop %v376
  %v383 = vtanh.pop %v377
  %v384 = vtanh.pop %v378
  %v385 = vtanh.pop %v379
  %v386 = vtanh.pop %v380
  %v387 = vpack.c.bf16 %v382, %v381
  %v388 = vpack.c.bf16 %v384, %v383
  %v389 = vpack.c.bf16 %v386, %v385
  %s390 = scalar_lea.vmem %s3, 64
  %v391 = vld [vmem:[%s390] sm:$0xf]
  %v392 = vld [vmem:[%s390 + $0x4] sm:$0xf]
  %v393 = vld [vmem:[%s390 + $0x8] sm:$0xf]
  %v394 = vld [vmem:[%s390 + $0xc] sm:$0xf]
  %v395 = vld [vmem:[%s390 + $0x10] sm:$0xf]
  %v396 = vld [vmem:[%s390 + $0x14] sm:$0xf]
  %v397 = vld [vmem:[%s390 + $0x18] sm:$0xf]
  %v398 = vld [vmem:[%s390 + $0x1c] sm:$0xf]
  %v399 = vld [vmem:[%s390 + $0x20] sm:$0xf]
  %v400 = vld [vmem:[%s390 + $0x24] sm:$0xf]
  %v401 = vld [vmem:[%s390 + $0x28] sm:$0xf]
  %v402 = vld [vmem:[%s390 + $0x2c] sm:$0xf]
  %v403 = vld [vmem:[%s390 + $0x30] sm:$0xf]
  %v404 = vld [vmem:[%s390 + $0x34] sm:$0xf]
  %v405 = vld [vmem:[%s390 + $0x38] sm:$0xf]
  %v406 = vld [vmem:[%s390 + $0x3c] sm:$0xf]
  %s407 = scalar_lea.vmem %s4, 1
  %v408 = vld [vmem:[%s407] sm:$0x1]
  %v410 = vperm.slane %v408, 0
  %v428 = vunpack.c.l.b16 %v391
  %v429 = vunpack.c.l.b16 %v392
  %v430 = vunpack.c.l.b16 %v393
  %v431 = vunpack.c.l.b16 %v394
  %v432 = vunpack.c.l.b16 %v395
  %v433 = vunpack.c.l.b16 %v396
  %v434 = vunpack.c.l.b16 %v397
  %v435 = vunpack.c.l.b16 %v398
  %v436 = vunpack.c.l.b16 %v399
  %v437 = vunpack.c.l.b16 %v400
  %v438 = vunpack.c.l.b16 %v401
  %v439 = vunpack.c.l.b16 %v402
  %v440 = vunpack.c.l.b16 %v403
  %v441 = vunpack.c.l.b16 %v404
  %v442 = vunpack.c.l.b16 %v405
  %v443 = vunpack.c.l.b16 %v406
  %v444 = vpack.c.b16 %v429, %v428
  %v445 = vpack.c.b16 %v431, %v430
  %v446 = vpack.c.b16 %v433, %v432
  %v447 = vpack.c.b16 %v435, %v434
  %v448 = vpack.c.b16 %v437, %v436
  %v449 = vpack.c.b16 %v439, %v438
  %v450 = vpack.c.b16 %v441, %v440
  %v451 = vpack.c.b16 %v443, %v442
  %460 = vmatpush.bf16.msra.mxu0 %v451
  %461 = vmatpush.bf16.msra.mxu0 %v450
  %462 = vmatpush.bf16.msra.mxu0 %v449
  %463 = vmatpush.bf16.msra.mxu0 %v448
  %464 = vmatpush.bf16.msra.mxu0 %v447
  %465 = vmatpush.bf16.msra.mxu0 %v446
  %466 = vmatpush.bf16.msra.mxu0 %v445
  %467 = vmatpush.bf16.msra.mxu0 %v444
  %468 = vmatmul.bf16.gmra.mxu0 %v369
  %v469 = vpop.f32.mrf.mxu0
  %v470 = vadd.f32 %v410, %v469
  %v471 = vpop.f32.mrf.mxu0
  %v472 = vadd.f32 %v410, %v471
  %473 = vmatmul.bf16.gmra.mxu0 %v370
  %v474 = vpop.f32.mrf.mxu0
  %v475 = vadd.f32 %v410, %v474
  %v476 = vpop.f32.mrf.mxu0
  %v477 = vadd.f32 %v410, %v476
  %478 = vmatmul.bf16.gmra.mxu0 %v371
  %v479 = vpop.f32.mrf.mxu0
  %v480 = vadd.f32 %v410, %v479
  %v481 = vpop.f32.mrf.mxu0
  %v482 = vadd.f32 %v410, %v481
  %483 = vdwg.mxu0
  %484 = vmatpush.bf16.msra.mxu0 %v451
  %485 = vmatpush.bf16.msra.mxu0 %v450
  %486 = vmatpush.bf16.msra.mxu0 %v449
  %487 = vmatpush.bf16.msra.mxu0 %v448
  %488 = vmatpush.bf16.msra.mxu0 %v447
  %489 = vmatpush.bf16.msra.mxu0 %v446
  %490 = vmatpush.bf16.msra.mxu0 %v445
  %491 = vmatpush.bf16.msra.mxu0 %v444
  %492 = vmatmul.bf16.gmra.mxu0 %v387
  %v493 = vpop.f32.mrf.mxu0
  %v494 = vadd.f32 %v410, %v493
  %v495 = vpop.f32.mrf.mxu0
  %v496 = vadd.f32 %v410, %v495
  %497 = vmatmul.bf16.gmra.mxu0 %v388
  %v498 = vpop.f32.mrf.mxu0
  %v499 = vadd.f32 %v410, %v498
  %v500 = vpop.f32.mrf.mxu0
  %v501 = vadd.f32 %v410, %v500
  %502 = vmatmul.bf16.gmra.mxu0 %v389
  %v503 = vpop.f32.mrf.mxu0
  %v504 = vadd.f32 %v410, %v503
  %v505 = vpop.f32.mrf.mxu0
  %v506 = vadd.f32 %v410, %v505
  %507 = vdwg.mxu0
  %v508 = vpack.c.bf16 %v472, %v470
  %v509 = vpack.c.bf16 %v477, %v475
  %v510 = vpack.c.bf16 %v482, %v480
  %v511 = vunpack.c.l.bf16 %v508
  %v512 = vunpack.c.h.bf16 %v508
  %v513 = vunpack.c.l.bf16 %v509
  %v514 = vunpack.c.h.bf16 %v509
  %v515 = vunpack.c.l.bf16 %v510
  %v516 = vunpack.c.h.bf16 %v510
  %v517 = vtanh.pop %v511
  %v518 = vtanh.pop %v512
  %v519 = vtanh.pop %v513
  %v520 = vtanh.pop %v514
  %v521 = vtanh.pop %v515
  %v522 = vtanh.pop %v516
  %v523 = vpack.c.bf16 %v518, %v517
  %v524 = vpack.c.bf16 %v520, %v519
  %v525 = vpack.c.bf16 %v522, %v521
  %v526 = vpack.c.bf16 %v496, %v494
  %v527 = vpack.c.bf16 %v501, %v499
  %v528 = vpack.c.bf16 %v506, %v504
  %v529 = vunpack.c.l.bf16 %v526
  %v530 = vunpack.c.h.bf16 %v526
  %v531 = vunpack.c.l.bf16 %v527
  %v532 = vunpack.c.h.bf16 %v527
  %v533 = vunpack.c.l.bf16 %v528
  %v534 = vunpack.c.h.bf16 %v528
  %v535 = vtanh.pop %v529
  %v536 = vtanh.pop %v530
  %v537 = vtanh.pop %v531
  %v538 = vtanh.pop %v532
  %v539 = vtanh.pop %v533
  %v540 = vtanh.pop %v534
  %v541 = vpack.c.bf16 %v536, %v535
  %v542 = vpack.c.bf16 %v538, %v537
  %v543 = vpack.c.bf16 %v540, %v539
  %s544 = scalar_lea.vmem %s3, 128
  %v545 = vld [vmem:[%s544] sm:$0xf]
  %v546 = vld [vmem:[%s544 + $0x4] sm:$0xf]
  %v547 = vld [vmem:[%s544 + $0x8] sm:$0xf]
  %v548 = vld [vmem:[%s544 + $0xc] sm:$0xf]
  %v549 = vld [vmem:[%s544 + $0x10] sm:$0xf]
  %v550 = vld [vmem:[%s544 + $0x14] sm:$0xf]
  %v551 = vld [vmem:[%s544 + $0x18] sm:$0xf]
  %v552 = vld [vmem:[%s544 + $0x1c] sm:$0xf]
  %v553 = vld [vmem:[%s544 + $0x20] sm:$0xf]
  %v554 = vld [vmem:[%s544 + $0x24] sm:$0xf]
  %v555 = vld [vmem:[%s544 + $0x28] sm:$0xf]
  %v556 = vld [vmem:[%s544 + $0x2c] sm:$0xf]
  %v557 = vld [vmem:[%s544 + $0x30] sm:$0xf]
  %v558 = vld [vmem:[%s544 + $0x34] sm:$0xf]
  %v559 = vld [vmem:[%s544 + $0x38] sm:$0xf]
  %v560 = vld [vmem:[%s544 + $0x3c] sm:$0xf]
  %s561 = scalar_lea.vmem %s4, 2
  %v562 = vld [vmem:[%s561] sm:$0x1]
  %v564 = vperm.slane %v562, 0
  %v582 = vunpack.c.l.b16 %v545
  %v583 = vunpack.c.l.b16 %v546
  %v584 = vunpack.c.l.b16 %v547
  %v585 = vunpack.c.l.b16 %v548
  %v586 = vunpack.c.l.b16 %v549
  %v587 = vunpack.c.l.b16 %v550
  %v588 = vunpack.c.l.b16 %v551
  %v589 = vunpack.c.l.b16 %v552
  %v590 = vunpack.c.l.b16 %v553
  %v591 = vunpack.c.l.b16 %v554
  %v592 = vunpack.c.l.b16 %v555
  %v593 = vunpack.c.l.b16 %v556
  %v594 = vunpack.c.l.b16 %v557
  %v595 = vunpack.c.l.b16 %v558
  %v596 = vunpack.c.l.b16 %v559
  %v597 = vunpack.c.l.b16 %v560
  %v598 = vpack.c.b16 %v583, %v582
  %v599 = vpack.c.b16 %v585, %v584
  %v600 = vpack.c.b16 %v587, %v586
  %v601 = vpack.c.b16 %v589, %v588
  %v602 = vpack.c.b16 %v591, %v590
  %v603 = vpack.c.b16 %v593, %v592
  %v604 = vpack.c.b16 %v595, %v594
  %v605 = vpack.c.b16 %v597, %v596
  %614 = vmatpush.bf16.msra.mxu0 %v605
  %615 = vmatpush.bf16.msra.mxu0 %v604
  %616 = vmatpush.bf16.msra.mxu0 %v603
  %617 = vmatpush.bf16.msra.mxu0 %v602
  %618 = vmatpush.bf16.msra.mxu0 %v601
  %619 = vmatpush.bf16.msra.mxu0 %v600
  %620 = vmatpush.bf16.msra.mxu0 %v599
  %621 = vmatpush.bf16.msra.mxu0 %v598
  %622 = vmatmul.bf16.gmra.mxu0 %v523
  %v623 = vpop.f32.mrf.mxu0
  %v624 = vadd.f32 %v564, %v623
  %v625 = vpop.f32.mrf.mxu0
  %v626 = vadd.f32 %v564, %v625
  %627 = vmatmul.bf16.gmra.mxu0 %v524
  %v628 = vpop.f32.mrf.mxu0
  %v629 = vadd.f32 %v564, %v628
  %v630 = vpop.f32.mrf.mxu0
  %v631 = vadd.f32 %v564, %v630
  %632 = vmatmul.bf16.gmra.mxu0 %v525
  %v633 = vpop.f32.mrf.mxu0
  %v634 = vadd.f32 %v564, %v633
  %v635 = vpop.f32.mrf.mxu0
  %v636 = vadd.f32 %v564, %v635
  %637 = vdwg.mxu0
  %638 = vmatpush.bf16.msra.mxu0 %v605
  %639 = vmatpush.bf16.msra.mxu0 %v604
  %640 = vmatpush.bf16.msra.mxu0 %v603
  %641 = vmatpush.bf16.msra.mxu0 %v602
  %642 = vmatpush.bf16.msra.mxu0 %v601
  %643 = vmatpush.bf16.msra.mxu0 %v600
  %644 = vmatpush.bf16.msra.mxu0 %v599
  %645 = vmatpush.bf16.msra.mxu0 %v598
  %646 = vmatmul.bf16.gmra.mxu0 %v541
  %v647 = vpop.f32.mrf.mxu0
  %v648 = vadd.f32 %v564, %v647
  %v649 = vpop.f32.mrf.mxu0
  %v650 = vadd.f32 %v564, %v649
  %651 = vmatmul.bf16.gmra.mxu0 %v542
  %v652 = vpop.f32.mrf.mxu0
  %v653 = vadd.f32 %v564, %v652
  %v654 = vpop.f32.mrf.mxu0
  %v655 = vadd.f32 %v564, %v654
  %656 = vmatmul.bf16.gmra.mxu0 %v543
  %v657 = vpop.f32.mrf.mxu0
  %v658 = vadd.f32 %v564, %v657
  %v659 = vpop.f32.mrf.mxu0
  %v660 = vadd.f32 %v564, %v659
  %661 = vdwg.mxu0
  %v662 = vpack.c.bf16 %v626, %v624
  %v663 = vpack.c.bf16 %v631, %v629
  %v664 = vpack.c.bf16 %v636, %v634
  %v665 = vunpack.c.l.bf16 %v662
  %v666 = vunpack.c.h.bf16 %v662
  %v667 = vunpack.c.l.bf16 %v663
  %v668 = vunpack.c.h.bf16 %v663
  %v669 = vunpack.c.l.bf16 %v664
  %v670 = vunpack.c.h.bf16 %v664
  %v671 = vtanh.pop %v665
  %v672 = vtanh.pop %v666
  %v673 = vtanh.pop %v667
  %v674 = vtanh.pop %v668
  %v675 = vtanh.pop %v669
  %v676 = vtanh.pop %v670
  %v677 = vpack.c.bf16 %v672, %v671
  %v678 = vpack.c.bf16 %v674, %v673
  %v679 = vpack.c.bf16 %v676, %v675
  %v680 = vpack.c.bf16 %v650, %v648
  %v681 = vpack.c.bf16 %v655, %v653
  %v682 = vpack.c.bf16 %v660, %v658
  %v683 = vunpack.c.l.bf16 %v680
  %v684 = vunpack.c.h.bf16 %v680
  %v685 = vunpack.c.l.bf16 %v681
  %v686 = vunpack.c.h.bf16 %v681
  %v687 = vunpack.c.l.bf16 %v682
  %v688 = vunpack.c.h.bf16 %v682
  %v689 = vtanh.pop %v683
  %v690 = vtanh.pop %v684
  %v691 = vtanh.pop %v685
  %v692 = vtanh.pop %v686
  %v693 = vtanh.pop %v687
  %v694 = vtanh.pop %v688
  %v695 = vpack.c.bf16 %v690, %v689
  %v696 = vpack.c.bf16 %v692, %v691
  %v697 = vpack.c.bf16 %v694, %v693
  %s698 = scalar_lea.vmem %s3, 192
  %v699 = vld [vmem:[%s698] sm:$0xf]
  %v700 = vld [vmem:[%s698 + $0x4] sm:$0xf]
  %v701 = vld [vmem:[%s698 + $0x8] sm:$0xf]
  %v702 = vld [vmem:[%s698 + $0xc] sm:$0xf]
  %v703 = vld [vmem:[%s698 + $0x10] sm:$0xf]
  %v704 = vld [vmem:[%s698 + $0x14] sm:$0xf]
  %v705 = vld [vmem:[%s698 + $0x18] sm:$0xf]
  %v706 = vld [vmem:[%s698 + $0x1c] sm:$0xf]
  %v707 = vld [vmem:[%s698 + $0x20] sm:$0xf]
  %v708 = vld [vmem:[%s698 + $0x24] sm:$0xf]
  %v709 = vld [vmem:[%s698 + $0x28] sm:$0xf]
  %v710 = vld [vmem:[%s698 + $0x2c] sm:$0xf]
  %v711 = vld [vmem:[%s698 + $0x30] sm:$0xf]
  %v712 = vld [vmem:[%s698 + $0x34] sm:$0xf]
  %v713 = vld [vmem:[%s698 + $0x38] sm:$0xf]
  %v714 = vld [vmem:[%s698 + $0x3c] sm:$0xf]
  %s715 = scalar_lea.vmem %s4, 3
  %v716 = vld [vmem:[%s715] sm:$0x1]
  %v718 = vperm.slane %v716, 0
  %v736 = vunpack.c.l.b16 %v699
  %v737 = vunpack.c.l.b16 %v700
  %v738 = vunpack.c.l.b16 %v701
  %v739 = vunpack.c.l.b16 %v702
  %v740 = vunpack.c.l.b16 %v703
  %v741 = vunpack.c.l.b16 %v704
  %v742 = vunpack.c.l.b16 %v705
  %v743 = vunpack.c.l.b16 %v706
  %v744 = vunpack.c.l.b16 %v707
  %v745 = vunpack.c.l.b16 %v708
  %v746 = vunpack.c.l.b16 %v709
  %v747 = vunpack.c.l.b16 %v710
  %v748 = vunpack.c.l.b16 %v711
  %v749 = vunpack.c.l.b16 %v712
  %v750 = vunpack.c.l.b16 %v713
  %v751 = vunpack.c.l.b16 %v714
  %v752 = vpack.c.b16 %v737, %v736
  %v753 = vpack.c.b16 %v739, %v738
  %v754 = vpack.c.b16 %v741, %v740
  %v755 = vpack.c.b16 %v743, %v742
  %v756 = vpack.c.b16 %v745, %v744
  %v757 = vpack.c.b16 %v747, %v746
  %v758 = vpack.c.b16 %v749, %v748
  %v759 = vpack.c.b16 %v751, %v750
  %768 = vmatpush.bf16.msra.mxu0 %v759
  %769 = vmatpush.bf16.msra.mxu0 %v758
  %770 = vmatpush.bf16.msra.mxu0 %v757
  %771 = vmatpush.bf16.msra.mxu0 %v756
  %772 = vmatpush.bf16.msra.mxu0 %v755
  %773 = vmatpush.bf16.msra.mxu0 %v754
  %774 = vmatpush.bf16.msra.mxu0 %v753
  %775 = vmatpush.bf16.msra.mxu0 %v752
  %776 = vmatmul.bf16.gmra.mxu0 %v677
  %v777 = vpop.f32.mrf.mxu0
  %v778 = vadd.f32 %v718, %v777
  %v779 = vpop.f32.mrf.mxu0
  %v780 = vadd.f32 %v718, %v779
  %781 = vmatmul.bf16.gmra.mxu0 %v678
  %v782 = vpop.f32.mrf.mxu0
  %v783 = vadd.f32 %v718, %v782
  %v784 = vpop.f32.mrf.mxu0
  %v785 = vadd.f32 %v718, %v784
  %786 = vmatmul.bf16.gmra.mxu0 %v679
  %v787 = vpop.f32.mrf.mxu0
  %v788 = vadd.f32 %v718, %v787
  %v789 = vpop.f32.mrf.mxu0
  %v790 = vadd.f32 %v718, %v789
  %791 = vdwg.mxu0
  %792 = vmatpush.bf16.msra.mxu0 %v759
  %793 = vmatpush.bf16.msra.mxu0 %v758
  %794 = vmatpush.bf16.msra.mxu0 %v757
  %795 = vmatpush.bf16.msra.mxu0 %v756
  %796 = vmatpush.bf16.msra.mxu0 %v755
  %797 = vmatpush.bf16.msra.mxu0 %v754
  %798 = vmatpush.bf16.msra.mxu0 %v753
  %799 = vmatpush.bf16.msra.mxu0 %v752
  %800 = vmatmul.bf16.gmra.mxu0 %v695
  %v801 = vpop.f32.mrf.mxu0
  %v802 = vadd.f32 %v718, %v801
  %v803 = vpop.f32.mrf.mxu0
  %v804 = vadd.f32 %v718, %v803
  %805 = vmatmul.bf16.gmra.mxu0 %v696
  %v806 = vpop.f32.mrf.mxu0
  %v807 = vadd.f32 %v718, %v806
  %v808 = vpop.f32.mrf.mxu0
  %v809 = vadd.f32 %v718, %v808
  %810 = vmatmul.bf16.gmra.mxu0 %v697
  %v811 = vpop.f32.mrf.mxu0
  %v812 = vadd.f32 %v718, %v811
  %v813 = vpop.f32.mrf.mxu0
  %v814 = vadd.f32 %v718, %v813
  %815 = vdwg.mxu0
  %v816 = vpack.c.bf16 %v780, %v778
  %v817 = vpack.c.bf16 %v785, %v783
  %v818 = vpack.c.bf16 %v790, %v788
  %v819 = vunpack.c.l.bf16 %v816
  %v820 = vunpack.c.h.bf16 %v816
  %v821 = vunpack.c.l.bf16 %v817
  %v822 = vunpack.c.h.bf16 %v817
  %v823 = vunpack.c.l.bf16 %v818
  %v824 = vunpack.c.h.bf16 %v818
  %v825 = vtanh.pop %v819
  %v826 = vtanh.pop %v820
  %v827 = vtanh.pop %v821
  %v828 = vtanh.pop %v822
  %v829 = vtanh.pop %v823
  %v830 = vtanh.pop %v824
  %v831 = vpack.c.bf16 %v826, %v825
  %v832 = vpack.c.bf16 %v828, %v827
  %v833 = vpack.c.bf16 %v830, %v829
  %v834 = vpack.c.bf16 %v804, %v802
  %v835 = vpack.c.bf16 %v809, %v807
  %v836 = vpack.c.bf16 %v814, %v812
  %v837 = vunpack.c.l.bf16 %v834
  %v838 = vunpack.c.h.bf16 %v834
  %v839 = vunpack.c.l.bf16 %v835
  %v840 = vunpack.c.h.bf16 %v835
  %v841 = vunpack.c.l.bf16 %v836
  %v842 = vunpack.c.h.bf16 %v836
  %v843 = vtanh.pop %v837
  %v844 = vtanh.pop %v838
  %v845 = vtanh.pop %v839
  %v846 = vtanh.pop %v840
  %v847 = vtanh.pop %v841
  %v848 = vtanh.pop %v842
  %v849 = vpack.c.bf16 %v844, %v843
  %v850 = vpack.c.bf16 %v846, %v845
  %v851 = vpack.c.bf16 %v848, %v847
  %s852 = scalar_lea.vmem %s3, 256
  %v853 = vld [vmem:[%s852] sm:$0xf]
  %v854 = vld [vmem:[%s852 + $0x4] sm:$0xf]
  %v855 = vld [vmem:[%s852 + $0x8] sm:$0xf]
  %v856 = vld [vmem:[%s852 + $0xc] sm:$0xf]
  %v857 = vld [vmem:[%s852 + $0x10] sm:$0xf]
  %v858 = vld [vmem:[%s852 + $0x14] sm:$0xf]
  %v859 = vld [vmem:[%s852 + $0x18] sm:$0xf]
  %v860 = vld [vmem:[%s852 + $0x1c] sm:$0xf]
  %v861 = vld [vmem:[%s852 + $0x20] sm:$0xf]
  %v862 = vld [vmem:[%s852 + $0x24] sm:$0xf]
  %v863 = vld [vmem:[%s852 + $0x28] sm:$0xf]
  %v864 = vld [vmem:[%s852 + $0x2c] sm:$0xf]
  %v865 = vld [vmem:[%s852 + $0x30] sm:$0xf]
  %v866 = vld [vmem:[%s852 + $0x34] sm:$0xf]
  %v867 = vld [vmem:[%s852 + $0x38] sm:$0xf]
  %v868 = vld [vmem:[%s852 + $0x3c] sm:$0xf]
  %s869 = scalar_lea.vmem %s4, 4
  %v870 = vld [vmem:[%s869] sm:$0x1]
  %v872 = vperm.slane %v870, 0
  %v890 = vunpack.c.l.b16 %v853
  %v891 = vunpack.c.l.b16 %v854
  %v892 = vunpack.c.l.b16 %v855
  %v893 = vunpack.c.l.b16 %v856
  %v894 = vunpack.c.l.b16 %v857
  %v895 = vunpack.c.l.b16 %v858
  %v896 = vunpack.c.l.b16 %v859
  %v897 = vunpack.c.l.b16 %v860
  %v898 = vunpack.c.l.b16 %v861
  %v899 = vunpack.c.l.b16 %v862
  %v900 = vunpack.c.l.b16 %v863
  %v901 = vunpack.c.l.b16 %v864
  %v902 = vunpack.c.l.b16 %v865
  %v903 = vunpack.c.l.b16 %v866
  %v904 = vunpack.c.l.b16 %v867
  %v905 = vunpack.c.l.b16 %v868
  %v906 = vpack.c.b16 %v891, %v890
  %v907 = vpack.c.b16 %v893, %v892
  %v908 = vpack.c.b16 %v895, %v894
  %v909 = vpack.c.b16 %v897, %v896
  %v910 = vpack.c.b16 %v899, %v898
  %v911 = vpack.c.b16 %v901, %v900
  %v912 = vpack.c.b16 %v903, %v902
  %v913 = vpack.c.b16 %v905, %v904
  %922 = vmatpush.bf16.msra.mxu0 %v913
  %923 = vmatpush.bf16.msra.mxu0 %v912
  %924 = vmatpush.bf16.msra.mxu0 %v911
  %925 = vmatpush.bf16.msra.mxu0 %v910
  %926 = vmatpush.bf16.msra.mxu0 %v909
  %927 = vmatpush.bf16.msra.mxu0 %v908
  %928 = vmatpush.bf16.msra.mxu0 %v907
  %929 = vmatpush.bf16.msra.mxu0 %v906
  %930 = vmatmul.bf16.gmra.mxu0 %v831
  %v931 = vpop.f32.mrf.mxu0
  %v932 = vadd.f32 %v872, %v931
  %v933 = vpop.f32.mrf.mxu0
  %v934 = vadd.f32 %v872, %v933
  %935 = vmatmul.bf16.gmra.mxu0 %v832
  %v936 = vpop.f32.mrf.mxu0
  %v937 = vadd.f32 %v872, %v936
  %v938 = vpop.f32.mrf.mxu0
  %v939 = vadd.f32 %v872, %v938
  %940 = vmatmul.bf16.gmra.mxu0 %v833
  %v941 = vpop.f32.mrf.mxu0
  %v942 = vadd.f32 %v872, %v941
  %v943 = vpop.f32.mrf.mxu0
  %v944 = vadd.f32 %v872, %v943
  %945 = vdwg.mxu0
  %946 = vmatpush.bf16.msra.mxu0 %v913
  %947 = vmatpush.bf16.msra.mxu0 %v912
  %948 = vmatpush.bf16.msra.mxu0 %v911
  %949 = vmatpush.bf16.msra.mxu0 %v910
  %950 = vmatpush.bf16.msra.mxu0 %v909
  %951 = vmatpush.bf16.msra.mxu0 %v908
  %952 = vmatpush.bf16.msra.mxu0 %v907
  %953 = vmatpush.bf16.msra.mxu0 %v906
  %954 = vmatmul.bf16.gmra.mxu0 %v849
  %v955 = vpop.f32.mrf.mxu0
  %v956 = vadd.f32 %v872, %v955
  %v957 = vpop.f32.mrf.mxu0
  %v958 = vadd.f32 %v872, %v957
  %959 = vmatmul.bf16.gmra.mxu0 %v850
  %v960 = vpop.f32.mrf.mxu0
  %v961 = vadd.f32 %v872, %v960
  %v962 = vpop.f32.mrf.mxu0
  %v963 = vadd.f32 %v872, %v962
  %964 = vmatmul.bf16.gmra.mxu0 %v851
  %v965 = vpop.f32.mrf.mxu0
  %v966 = vadd.f32 %v872, %v965
  %v967 = vpop.f32.mrf.mxu0
  %v968 = vadd.f32 %v872, %v967
  %969 = vdwg.mxu0
  %v970 = vpack.c.bf16 %v932, %v932
  %v971 = vpack.c.bf16 %v934, %v934
  %v972 = vpack.c.bf16 %v937, %v937
  %v973 = vpack.c.bf16 %v939, %v939
  %v974 = vpack.c.bf16 %v942, %v942
  %v975 = vpack.c.bf16 %v944, %v944
  %v976 = vunpack.c.l.bf16 %v970
  %v977 = vunpack.c.l.bf16 %v971
  %v978 = vunpack.c.l.bf16 %v972
  %v979 = vunpack.c.l.bf16 %v973
  %v980 = vunpack.c.l.bf16 %v974
  %v981 = vunpack.c.l.bf16 %v975
  %v982 = vtanh.pop %v976
  %v983 = vtanh.pop %v977
  %v984 = vtanh.pop %v978
  %v985 = vtanh.pop %v979
  %v986 = vtanh.pop %v980
  %v987 = vtanh.pop %v981
  %v988 = vpack.c.bf16 %v982, %v982
  %v989 = vpack.c.bf16 %v983, %v983
  %v990 = vpack.c.bf16 %v984, %v984
  %v991 = vpack.c.bf16 %v985, %v985
  %v992 = vpack.c.bf16 %v986, %v986
  %v993 = vpack.c.bf16 %v987, %v987
  %v994 = vpack.c.bf16 %v956, %v956
  %v995 = vpack.c.bf16 %v958, %v958
  %v996 = vpack.c.bf16 %v961, %v961
  %v997 = vpack.c.bf16 %v963, %v963
  %v998 = vpack.c.bf16 %v966, %v966
  %v999 = vpack.c.bf16 %v968, %v968
  %v1000 = vunpack.c.l.bf16 %v994
  %v1001 = vunpack.c.l.bf16 %v995
  %v1002 = vunpack.c.l.bf16 %v996
  %v1003 = vunpack.c.l.bf16 %v997
  %v1004 = vunpack.c.l.bf16 %v998
  %v1005 = vunpack.c.l.bf16 %v999
  %v1006 = vtanh.pop %v1000
  %v1007 = vtanh.pop %v1001
  %v1008 = vtanh.pop %v1002
  %v1009 = vtanh.pop %v1003
  %v1010 = vtanh.pop %v1004
  %v1011 = vtanh.pop %v1005
  %v1012 = vpack.c.bf16 %v1006, %v1006
  %v1013 = vpack.c.bf16 %v1007, %v1007
  %v1014 = vpack.c.bf16 %v1008, %v1008
  %v1015 = vpack.c.bf16 %v1009, %v1009
  %v1016 = vpack.c.bf16 %v1010, %v1010
  %v1017 = vpack.c.bf16 %v1011, %v1011
  %v1024 = vunpack.c.l.b16 %v988
  %v1025 = vunpack.c.l.b16 %v989
  %v1026 = vunpack.c.l.b16 %v990
  %v1027 = vunpack.c.l.b16 %v991
  %v1028 = vunpack.c.l.b16 %v992
  %v1029 = vunpack.c.l.b16 %v993
  %v1030 = vpack.c.b16 %v1025, %v1024
  %v1031 = vpack.c.b16 %v1027, %v1026
  %v1032 = vpack.c.b16 %v1029, %v1028
  %v1042 = vunpack.c.l.b16 %v1012
  %v1043 = vunpack.c.l.b16 %v1013
  %v1044 = vunpack.c.l.b16 %v1014
  %v1045 = vunpack.c.l.b16 %v1015
  %v1046 = vunpack.c.l.b16 %v1016
  %v1047 = vunpack.c.l.b16 %v1017
  %v1048 = vpack.c.b16 %v1043, %v1042
  %v1049 = vpack.c.b16 %v1045, %v1044
  %v1050 = vpack.c.b16 %v1047, %v1046
  %v1054 = vld [vmem:[%s5] sm:$0xf]
  %v1055 = vld [vmem:[%s5 + $0x4] sm:$0xf]
  %v1056 = vld [vmem:[%s5 + $0x8] sm:$0xf]
  %v1057 = vld [vmem:[%s5 + $0xc] sm:$0xf]
  %v1058 = vld [vmem:[%s5 + $0x10] sm:$0xf]
  %v1059 = vld [vmem:[%s5 + $0x14] sm:$0xf]
  %v1060 = vld [vmem:[%s5 + $0x18] sm:$0xf]
  %v1061 = vld [vmem:[%s5 + $0x1c] sm:$0xf]
  %v1062 = vld [vmem:[%s5 + $0x20] sm:$0xf]
  %v1063 = vld [vmem:[%s5 + $0x24] sm:$0xf]
  %v1064 = vld [vmem:[%s5 + $0x28] sm:$0xf]
  %v1065 = vld [vmem:[%s5 + $0x2c] sm:$0xf]
  %v1066 = vld [vmem:[%s5 + $0x30] sm:$0xf]
  %v1067 = vld [vmem:[%s5 + $0x34] sm:$0xf]
  %v1068 = vld [vmem:[%s5 + $0x38] sm:$0xf]
  %v1069 = vld [vmem:[%s5 + $0x3c] sm:$0xf]
  %v1070 = vld [vmem:[%s6] sm:$0x1]
  %v1072 = vperm.slane %v1070, 0
  %v1090 = vunpack.c.l.b16 %v1054
  %v1091 = vunpack.c.l.b16 %v1055
  %v1092 = vunpack.c.l.b16 %v1056
  %v1093 = vunpack.c.l.b16 %v1057
  %v1094 = vunpack.c.l.b16 %v1058
  %v1095 = vunpack.c.l.b16 %v1059
  %v1096 = vunpack.c.l.b16 %v1060
  %v1097 = vunpack.c.l.b16 %v1061
  %v1098 = vunpack.c.l.b16 %v1062
  %v1099 = vunpack.c.l.b16 %v1063
  %v1100 = vunpack.c.l.b16 %v1064
  %v1101 = vunpack.c.l.b16 %v1065
  %v1102 = vunpack.c.l.b16 %v1066
  %v1103 = vunpack.c.l.b16 %v1067
  %v1104 = vunpack.c.l.b16 %v1068
  %v1105 = vunpack.c.l.b16 %v1069
  %v1106 = vpack.c.b16 %v1091, %v1090
  %v1107 = vpack.c.b16 %v1093, %v1092
  %v1108 = vpack.c.b16 %v1095, %v1094
  %v1109 = vpack.c.b16 %v1097, %v1096
  %v1110 = vpack.c.b16 %v1099, %v1098
  %v1111 = vpack.c.b16 %v1101, %v1100
  %v1112 = vpack.c.b16 %v1103, %v1102
  %v1113 = vpack.c.b16 %v1105, %v1104
  %1122 = vmatpush.bf16.msra.mxu0 %v1113
  %1123 = vmatpush.bf16.msra.mxu0 %v1112
  %1124 = vmatpush.bf16.msra.mxu0 %v1111
  %1125 = vmatpush.bf16.msra.mxu0 %v1110
  %1126 = vmatpush.bf16.msra.mxu0 %v1109
  %1127 = vmatpush.bf16.msra.mxu0 %v1108
  %1128 = vmatpush.bf16.msra.mxu0 %v1107
  %1129 = vmatpush.bf16.msra.mxu0 %v1106
  %1130 = vmatmul.bf16.gmra.mxu0 %v1030
  %v1131 = vpop.f32.mrf.mxu0
  %v1132 = vadd.f32 %v1072, %v1131
  %v1133 = vpop.f32.mrf.mxu0
  %v1134 = vadd.f32 %v1072, %v1133
  %1135 = vmatmul.bf16.gmra.mxu0 %v1031
  %v1136 = vpop.f32.mrf.mxu0
  %v1137 = vadd.f32 %v1072, %v1136
  %v1138 = vpop.f32.mrf.mxu0
  %v1139 = vadd.f32 %v1072, %v1138
  %1140 = vmatmul.bf16.gmra.mxu0 %v1032
  %v1141 = vpop.f32.mrf.mxu0
  %v1142 = vadd.f32 %v1072, %v1141
  %v1143 = vpop.f32.mrf.mxu0
  %v1144 = vadd.f32 %v1072, %v1143
  %1145 = vmatmul.bf16.gmra.mxu0 %v1048
  %v1146 = vpop.f32.mrf.mxu0
  %v1147 = vadd.f32 %v1072, %v1146
  %v1148 = vpop.f32.mrf.mxu0
  %v1149 = vadd.f32 %v1072, %v1148
  %1150 = vmatmul.bf16.gmra.mxu0 %v1049
  %v1151 = vpop.f32.mrf.mxu0
  %v1152 = vadd.f32 %v1072, %v1151
  %v1153 = vpop.f32.mrf.mxu0
  %v1154 = vadd.f32 %v1072, %v1153
  %1155 = vmatmul.bf16.gmra.mxu0 %v1050
  %v1156 = vpop.f32.mrf.mxu0
  %v1157 = vadd.f32 %v1072, %v1156
  %v1158 = vpop.f32.mrf.mxu0
  %v1159 = vadd.f32 %v1072, %v1158
  %1160 = vdwg.mxu0
  %vm1161 = vcmask 64512
  %1162 = vst.msk [vmem:[%s7] sm:$0xff] %vm1161, %v1132
  %1163 = vst.msk [vmem:[%s7 + $0x8] sm:$0xff] %vm1161, %v1134
  %1164 = vst.msk [vmem:[%s7 + $0x10] sm:$0xff] %vm1161, %v1137
  %1165 = vst.msk [vmem:[%s7 + $0x18] sm:$0xff] %vm1161, %v1139
  %1166 = vst.msk [vmem:[%s7 + $0x20] sm:$0xff] %vm1161, %v1142
  %1167 = vst.msk [vmem:[%s7 + $0x28] sm:$0xff] %vm1161, %v1144
  %1168 = vst.msk [vmem:[%s7 + $0x30] sm:$0xff] %vm1161, %v1147
  %1169 = vst.msk [vmem:[%s7 + $0x38] sm:$0xff] %vm1161, %v1149
  %1170 = vst.msk [vmem:[%s7 + $0x40] sm:$0xff] %vm1161, %v1152
  %1171 = vst.msk [vmem:[%s7 + $0x48] sm:$0xff] %vm1161, %v1154
  %1172 = vst.msk [vmem:[%s7 + $0x50] sm:$0xff] %vm1161, %v1157
  %1173 = vst.msk [vmem:[%s7 + $0x58] sm:$0xff] %vm1161, %v1159
  // Predicated region
  $region30: #{pinn_net_sir.1} parent=0 // pred_check
    _
  $region31: #{pinn_net_sir.1} parent=0 // pred_check_branch
    %1175 = sbr.rel (0) target = $region33
  $region32: #{pinn_net_sir.1} parent=0 // pred_region
    _
  $region33: #{pinn_net_sir.1} parent=0 // pred_fallthru
    _
  // Predicated region
  $region34: #{pinn_net_sir.1} parent=0 // pred_check
    _
  $region35: #{pinn_net_sir.1} parent=0 // pred_check_branch
    %1177 = sbr.rel (0) target = $region37
  $region36: #{pinn_net_sir.1} parent=0 // pred_region
    _
  $region37: #{pinn_net_sir.1} parent=0 // pred_fallthru
    _

</llo_original>
